<compile_context>
chip_gen: v5e
topology: v5e:2x2
jax: 0.10.0
libtpu: 0.0.40
codegen_flags: <defaults>
</compile_context>

<pallas_src>
import functools

import jax
import jax.numpy as jnp
from jax.experimental import pallas as pl
from jax.experimental.pallas import tpu as pltpu


def _round_up(x, m):
    return ((x + m - 1) // m) * m


def _sublane_multiple(dtype):
    # rows per packed sublane for this dtype: f32 -> 8, bf16 -> 16, int8/fp8 -> 32
    return {4: 8, 2: 16, 1: 32}[jnp.dtype(dtype).itemsize]


# ---------------------------------------------------------------------------
# Kernel
# ---------------------------------------------------------------------------
def classifier_kernel(x_ref, w1_ref, b1_ref, w2_ref, b2_ref, o_ref):
    # Cast activations to the MXU input dtype *inside* the kernel (VPU cast
    # hides under the MXU; avoids a wrapper-side cast pass over HBM).
    x = x_ref[...].astype(w1_ref.dtype)
    # pre_classifier: x @ W1 with f32 accumulation; bias add + tanh in f32
    # (v5e-safe elementwise path, tanh goes to the EUP slot).
    pre = jnp.dot(x, w1_ref[...], preferred_element_type=jnp.float32)
    pre = jnp.tanh(pre + b1_ref[...])
    # classifier: tanh(pre) @ W2 + b2.
    logits = jnp.dot(pre.astype(w2_ref.dtype), w2_ref[...],
                     preferred_element_type=jnp.float32)
    o_ref[...] = (logits + b2_ref[...]).astype(o_ref.dtype)


# ---------------------------------------------------------------------------
# One-time parameter preparation (init-time; hoisted out of the forward path)
# ---------------------------------------------------------------------------
def prepare_classifier_params(w1, b1, w2, b2, *, compute_dtype=jnp.bfloat16):
    """Pad parameters to lane-dense multiples of 128 and cast to the MXU
    input dtype ONCE.  Zero padding of the contraction dims is mathematically
    inert for both matmuls.

    w1: (D_in, H)   b1: (H,) or (1, H)   w2: (H, C)   b2: (C,) or (1, C)
    """
    D_in, H = w1.shape
    H2, C = w2.shape
    assert H2 == H, "w1/w2 inner dims must match"
    D_pad, H_pad, C_pad = (_round_up(d, 128) for d in (D_in, H, C))

    w1_p = jnp.zeros((D_pad, H_pad), compute_dtype).at[:D_in, :H].set(
        w1.astype(compute_dtype))
    b1_p = jnp.zeros((1, H_pad), jnp.float32).at[:, :H].set(
        jnp.reshape(b1, (1, H)).astype(jnp.float32))
    w2_p = jnp.zeros((H_pad, C_pad), compute_dtype).at[:H, :C].set(
        w2.astype(compute_dtype))
    b2_p = jnp.zeros((1, C_pad), jnp.float32).at[:, :C].set(
        jnp.reshape(b2, (1, C)).astype(jnp.float32))

    return {"w1": w1_p, "b1": b1_p, "w2": w2_p, "b2": b2_p,
            "d_in": D_in, "h": H, "c": C}


def _pick_tile_b(B, sub, tile_b):
    if tile_b is not None:
        return max(sub, min(_round_up(tile_b, sub), _round_up(B, sub)))
    if B < 256:
        # small batch: a single sublane-aligned tile, no padded-row waste
        # beyond the sublane multiple
        return _round_up(B, sub)
    if B <= 1024:
        # moderate batch: guarantee >= 2 grid steps so the "parallel" batch
        # axis can be sharded across both v7x TensorCores
        return max(_round_up(pl.cdiv(B, 2), 128), sub)
    # large batch: 512-row tiles (~85% of HBM roofline measured on v6e, and a
    # multiple of the 256-wide MXU M dimension)
    return 512


# ---------------------------------------------------------------------------
# Forward
# ---------------------------------------------------------------------------
def classifier_forward(hidden, params, *, tile_b=None):
    """Fused Linear -> tanh -> Linear.  hidden: (B, D_in) -> logits (B, C)."""
    B, D_in = hidden.shape
    assert D_in == params["d_in"], "hidden feature dim mismatch"
    D_pad, H_pad = params["w1"].shape
    C_pad = params["w2"].shape[1]
    C = params["c"]
    out_dtype = hidden.dtype
    compute_dtype = params["w1"].dtype

    # Only zero-pad the contraction dim when genuinely unaligned (zero columns
    # are inert).  For aligned D_in (e.g. 768) the caller's activations are
    # DMA'd directly: no extra HBM pass.
    if D_in != D_pad:
        x = jnp.zeros((B, D_pad), hidden.dtype).at[:, :D_in].set(hidden)
    else:
        x = hidden

    # Batch tiling with a ragged last block instead of batch padding:
    # out-of-bounds rows are garbage on input (rows are independent) and
    # dropped on output write.
    sub = max(_sublane_multiple(x.dtype), _sublane_multiple(out_dtype))
    tb = _pick_tile_b(B, sub, tile_b)
    grid = (pl.cdiv(B, tb),)

    # Constant-index (VMEM-resident) weights/biases: single-buffered.
    resident = functools.partial(pl.BlockSpec,
                                 index_map=lambda i: (0, 0),
                                 pipeline_mode=pl.Buffered(1))

    # Explicit VMEM budget: 2 buffers for the pipelined x/out tiles, 1 for the
    # resident weights/biases, plus slack for Mosaic internal scratch.
    w_bytes = ((params["w1"].size + params["w2"].size)
               * jnp.dtype(compute_dtype).itemsize
               + (params["b1"].size + params["b2"].size) * 4)
    x_tile_bytes = tb * D_pad * jnp.dtype(x.dtype).itemsize
    o_tile_bytes = tb * C_pad * jnp.dtype(out_dtype).itemsize
    vmem_limit = int(min(64 << 20,
                         max(8 << 20,
                             2 * (x_tile_bytes + o_tile_bytes)
                             + w_bytes + (4 << 20))))

    b_work = grid[0] * tb
    cost = pl.CostEstimate(
        flops=2 * b_work * D_pad * H_pad + 2 * b_work * H_pad * C_pad,
        transcendentals=b_work * H_pad,
        bytes_accessed=(x.size * jnp.dtype(x.dtype).itemsize
                        + w_bytes
                        + B * C_pad * jnp.dtype(out_dtype).itemsize),
    )

    out = pl.pallas_call(
        classifier_kernel,
        out_shape=jax.ShapeDtypeStruct((B, C_pad), out_dtype),
        grid=grid,
        in_specs=[
            pl.BlockSpec((tb, D_pad), lambda i: (i, 0)),   # activations: pipelined
            resident((D_pad, H_pad)),                      # W1 (VMEM-resident)
            resident((1, H_pad)),                          # b1
            resident((H_pad, C_pad)),                      # W2
            resident((1, C_pad)),                          # b2
        ],
        out_specs=pl.BlockSpec((tb, C_pad), lambda i: (i, 0)),
        compiler_params=pltpu.CompilerParams(
            dimension_semantics=("parallel",),
            vmem_limit_bytes=vmem_limit,
        ),
        cost_estimate=cost,
    )(x, params["w1"], params["b1"], params["w2"], params["b2"])

    return out if C == C_pad else out[:, :C]


if __name__ == "__main__":
    # Module-consistent small shapes:
    #   batch=8, input_dim=32, pre_classifier_dim=64, num_classes=16
    B, D_IN, H, C = 8, 32, 64, 16

    key = jax.random.PRNGKey(0)
    k_x, k_w1, k_b1, k_w2, k_b2 = jax.random.split(key, 5)

    hidden = jax.random.normal(k_x, (B, D_IN), dtype=jnp.float32)

    # Deterministic synthetic parameters (roughly nn.Linear-like scale).
    w1 = jax.random.normal(k_w1, (D_IN, H), jnp.float32) * (1.0 / jnp.sqrt(D_IN))
    b1 = jax.random.normal(k_b1, (H,), jnp.float32) * 0.01
    w2 = jax.random.normal(k_w2, (H, C), jnp.float32) * (1.0 / jnp.sqrt(H))
    b2 = jax.random.normal(k_b2, (C,), jnp.float32) * 0.01

    ref = jnp.tanh(hidden @ w1 + b1) @ w2 + b2

    # f32 MXU-input path: matches the PyTorch module numerics tightly.
    params_f32 = prepare_classifier_params(w1, b1, w2, b2,
                                           compute_dtype=jnp.float32)
    logits = jax.block_until_ready(classifier_forward(hidden, params_f32))
    assert logits.shape == (B, C)
    assert jnp.allclose(logits, ref, atol=1e-5, rtol=1e-5)

    # Default bf16 MXU-input path (f32 accumulation, f32 bias add + tanh):
    # the recommended mode on the MXU-bound v5e, fine on v6e/v7x.
    params_bf16 = prepare_classifier_params(w1, b1, w2, b2)
    logits_bf16 = jax.block_until_ready(classifier_forward(hidden, params_bf16))
    assert logits_bf16.shape == (B, C)
    assert jnp.allclose(logits_bf16, ref, atol=5e-2, rtol=5e-2)

    print("KERNEL_OK")
</pallas_src>

<mosaic_0001>
module attributes {stable_mosaic.version = 11 : i64} {
  func.func @classifier_kernel(%arg0: i32, %arg1: memref<8x128xf32, #tpu.memory_space<vmem>>, %arg2: memref<128x128xf32, #tpu.memory_space<vmem>>, %arg3: memref<1x128xf32, #tpu.memory_space<vmem>>, %arg4: memref<128x128xf32, #tpu.memory_space<vmem>>, %arg5: memref<1x128xf32, #tpu.memory_space<vmem>>, %arg6: memref<8x128xf32, #tpu.memory_space<vmem>>) attributes {dimension_semantics = [#tpu.dimension_semantics<parallel>], iteration_bounds = array<i64: 1>, scalar_prefetch = 0 : i64, scratch_operands = 0 : i64, tpu.core_type = #tpu.core_type<tc>, window_params = [{transform_indices = @transform_0, window_bounds = array<i64: 8, 128>}, {pipeline_mode = #tpu.pipeline_mode<synchronous>, transform_indices = @transform_1, window_bounds = array<i64: 128, 128>}, {pipeline_mode = #tpu.pipeline_mode<synchronous>, transform_indices = @transform_2, window_bounds = array<i64: 1, 128>}, {pipeline_mode = #tpu.pipeline_mode<synchronous>, transform_indices = @transform_3, window_bounds = array<i64: 128, 128>}, {pipeline_mode = #tpu.pipeline_mode<synchronous>, transform_indices = @transform_4, window_bounds = array<i64: 1, 128>}, {transform_indices = @transform_5, window_bounds = array<i64: 8, 128>}]} {
    %c0 = arith.constant 0 : index
    %c0_0 = arith.constant 0 : index
    %0 = vector.load %arg1[%c0, %c0_0] : memref<8x128xf32, #tpu.memory_space<vmem>>, vector<8x128xf32>
    %c0_1 = arith.constant 0 : index
    %c0_2 = arith.constant 0 : index
    %1 = vector.load %arg2[%c0_1, %c0_2] : memref<128x128xf32, #tpu.memory_space<vmem>>, vector<128x128xf32>
    %cst = arith.constant dense<0.000000e+00> : vector<8x128xf32>
    %2 = tpu.matmul %0, %1, %cst {dimension_numbers = #tpu.dot_dimension_numbers<[1], [0], [0], [1], [0, 0, 1, 1], [], []>} : vector<8x128xf32>, vector<128x128xf32>, vector<8x128xf32> -> vector<8x128xf32>
    %c0_3 = arith.constant 0 : index
    %c0_4 = arith.constant 0 : index
    %3 = vector.load %arg3[%c0_3, %c0_4] : memref<1x128xf32, #tpu.memory_space<vmem>>, vector<1x128xf32>
    %4 = vector.broadcast %3 : vector<1x128xf32> to vector<8x128xf32>
    %5 = arith.addf %2, %4 : vector<8x128xf32>
    %6 = math.tanh %5 : vector<8x128xf32>
    %c0_5 = arith.constant 0 : index
    %c0_6 = arith.constant 0 : index
    %7 = vector.load %arg4[%c0_5, %c0_6] : memref<128x128xf32, #tpu.memory_space<vmem>>, vector<128x128xf32>
    %cst_7 = arith.constant dense<0.000000e+00> : vector<8x128xf32>
    %8 = tpu.matmul %6, %7, %cst_7 {dimension_numbers = #tpu.dot_dimension_numbers<[1], [0], [0], [1], [0, 0, 1, 1], [], []>} : vector<8x128xf32>, vector<128x128xf32>, vector<8x128xf32> -> vector<8x128xf32>
    %c0_8 = arith.constant 0 : index
    %c0_9 = arith.constant 0 : index
    %9 = vector.load %arg5[%c0_8, %c0_9] : memref<1x128xf32, #tpu.memory_space<vmem>>, vector<1x128xf32>
    %10 = vector.broadcast %9 : vector<1x128xf32> to vector<8x128xf32>
    %11 = arith.addf %8, %10 : vector<8x128xf32>
    %c0_10 = arith.constant 0 : index
    %c0_11 = arith.constant 0 : index
    %12 = vector.load %arg6[%c0_10, %c0_11] : memref<8x128xf32, #tpu.memory_space<vmem>>, vector<8x128xf32>
    tpu.vector_store %arg6[%c0_10, %c0_11], %11 {strides = array<i32>} : memref<8x128xf32, #tpu.memory_space<vmem>>, vector<8x128xf32>,
    return
  }
  func.func @transform_0(%arg0: i32) -> (i32, i32) {
    %c0_i32 = arith.constant 0 : i32
    %c0_i32_0 = arith.constant 0 : i32
    return %arg0, %c0_i32 : i32, i32
  }
  func.func @transform_1(%arg0: i32) -> (i32, i32) {
    %c0_i32 = arith.constant 0 : i32
    %c0_i32_0 = arith.constant 0 : i32
    %c0_i32_1 = arith.constant 0 : i32
    return %c0_i32, %c0_i32_0 : i32, i32
  }
  func.func @transform_2(%arg0: i32) -> (i32, i32) {
    %c0_i32 = arith.constant 0 : i32
    %c0_i32_0 = arith.constant 0 : i32
    %c0_i32_1 = arith.constant 0 : i32
    return %c0_i32, %c0_i32_0 : i32, i32
  }
  func.func @transform_3(%arg0: i32) -> (i32, i32) {
    %c0_i32 = arith.constant 0 : i32
    %c0_i32_0 = arith.constant 0 : i32
    %c0_i32_1 = arith.constant 0 : i32
    return %c0_i32, %c0_i32_0 : i32, i32
  }
  func.func @transform_4(%arg0: i32) -> (i32, i32) {
    %c0_i32 = arith.constant 0 : i32
    %c0_i32_0 = arith.constant 0 : i32
    %c0_i32_1 = arith.constant 0 : i32
    return %c0_i32, %c0_i32_0 : i32, i32
  }
  func.func @transform_5(%arg0: i32) -> (i32, i32) {
    %c0_i32 = arith.constant 0 : i32
    %c0_i32_0 = arith.constant 0 : i32
    return %arg0, %c0_i32 : i32, i32
  }
}

</mosaic_0001>

<llo_original>
// kernel: tpu_custom_call.1
$region0: #{tpu_custom_call.1}
  #allocation0 [shape = 'u32[]', space=smem, size = 0x4, offset = 0x4, fixed_abs, tag = 'smem constant byte address 0x4 - core index']
  #allocation1 [shape = 'u32[72,128]{1,0:T(1,128)}', space=vmem, size = 0x9000, scoped, tag = 'internal scratch']
  %s0 = inlined_call_operand.hbm [shape: f32[8,128], index: 0, kind: input, shape index: {}]
  %s1 = inlined_call_operand.hbm [shape: f32[128,128], index: 1, kind: input, shape index: {}]
  %s2 = inlined_call_operand.vmem [shape: f32[1,128], index: 2, kind: input, shape index: {}]
  %s3 = inlined_call_operand.hbm [shape: f32[128,128], index: 3, kind: input, shape index: {}]
  %s4 = inlined_call_operand.vmem [shape: f32[1,128], index: 4, kind: input, shape index: {}]
  %s5 = inlined_call_operand.hbm [shape: f32[8,128], index: 5, kind: output, shape index: {}]
  %s6 = sld [smem:[#allocation0]]
  $region42: #{tpu_custom_call.1} parent=0
    _
  %s8 = ssub.s32 1, %s6
  %s9 = scalar_select 0, %s8, %s6
  $region1: #{tpu_custom_call.1} parent=0
    #allocation2 [shape = 'u8[4096]{0}', space=vmem, size = 0x1000, scoped, tag = 'input window, operand 0, single buffered']
    #allocation3 [shape = 's32[1]{0}', space=sflag, size = 0x4, scoped, tag = 'scoped memory for tpu_custom_call.1']
    #allocation4 [shape = 's32[1]{0}', space=sflag, size = 0x4, scoped, tag = 'scoped memory for tpu_custom_call.1']
    #allocation5 [shape = 'u8[65536]{0}', space=vmem, size = 0x10000, scoped, tag = 'input window, operand 1, single buffered']
    #allocation6 [shape = 's32[1]{0}', space=sflag, size = 0x4, scoped, tag = 'scoped memory for tpu_custom_call.1']
    #allocation7 [shape = 'u8[65536]{0}', space=vmem, size = 0x10000, scoped, tag = 'input window, operand 3, single buffered']
    #allocation8 [shape = 'u8[4096]{0}', space=vmem, size = 0x1000, scoped, tag = 'output window, operand 0, single buffered']
    %10 = vsyncpa [#allocation3], 0
    %11 = vsyncpa [#allocation6], 0
    %12 = vsyncpa [#allocation4], 0
    // Predicated region
    $region2: #{tpu_custom_call.1} parent=1 // pred_check
      _
    $region3: #{tpu_custom_call.1} parent=1 // pred_check_branch
      %14 = sbr.rel (0) target = $region5
    $region4: #{tpu_custom_call.1} parent=1 // pred_region
      %16 = vsyncadd [#allocation3], 0
      %s18 = sshll.u32 %s0, 4
      %s19 = int_to_ptr.hbm [resolvable:$true] %s18
      %s20 = sshll.u32 [#allocation2], 4
      %s21 = int_to_ptr.vmem [resolvable:$true] %s20
      %23 = dma.hbm_to_vmem [thread:$0]  %s19, 128, %s21, [#allocation3]
    $region5: #{tpu_custom_call.1} parent=1 // pred_fallthru
      _
    // Predicated region
    $region6: #{tpu_custom_call.1} parent=1 // pred_check
      _
    $region7: #{tpu_custom_call.1} parent=1 // pred_check_branch
      %25 = sbr.rel (0) target = $region9
    $region8: #{tpu_custom_call.1} parent=1 // pred_region
      %27 = vsyncadd [#allocation6], 0
      %s28 = sshll.u32 %s1, 4
      %s29 = int_to_ptr.hbm [resolvable:$true] %s28
      %s30 = sshll.u32 [#allocation5], 4
      %s31 = int_to_ptr.vmem [resolvable:$true] %s30
      %36 = dma.hbm_to_vmem [thread:$0]  %s29, 2048, %s31, [#allocation6], 128, 128, 8
    $region9: #{tpu_custom_call.1} parent=1 // pred_fallthru
      _
    // Predicated region
    $region10: #{tpu_custom_call.1} parent=1 // pred_check
      _
    $region11: #{tpu_custom_call.1} parent=1 // pred_check_branch
      %38 = sbr.rel (0) target = $region13
    $region12: #{tpu_custom_call.1} parent=1 // pred_region
      _
    $region13: #{tpu_custom_call.1} parent=1 // pred_fallthru
      _
    // Predicated region
    $region14: #{tpu_custom_call.1} parent=1 // pred_check
      _
    $region15: #{tpu_custom_call.1} parent=1 // pred_check_branch
      %40 = sbr.rel (0) target = $region17
    $region16: #{tpu_custom_call.1} parent=1 // pred_region
      %42 = vsyncadd [#allocation6], 0
      %s43 = sshll.u32 %s3, 4
      %s44 = int_to_ptr.hbm [resolvable:$true] %s43
      %s45 = sshll.u32 [#allocation7], 4
      %s46 = int_to_ptr.vmem [resolvable:$true] %s45
      %51 = dma.hbm_to_vmem [thread:$0]  %s44, 2048, %s46, [#allocation6], 128, 128, 8
    $region17: #{tpu_custom_call.1} parent=1 // pred_fallthru
      _
    // Predicated region
    $region18: #{tpu_custom_call.1} parent=1 // pred_check
      _
    $region19: #{tpu_custom_call.1} parent=1 // pred_check_branch
      %53 = sbr.rel (0) target = $region21
    $region20: #{tpu_custom_call.1} parent=1 // pred_region
      _
    $region21: #{tpu_custom_call.1} parent=1 // pred_fallthru
      _
    // Predicated region
    $region22: #{tpu_custom_call.1} parent=1 // pred_check
      _
    $region23: #{tpu_custom_call.1} parent=1 // pred_check_branch
      %55 = sbr.rel (0) target = $region25
    $region24: #{tpu_custom_call.1} parent=1 // pred_region
      %57 = dma.done [#allocation3], 128
    $region25: #{tpu_custom_call.1} parent=1 // pred_fallthru
      _
    // Predicated region
    $region26: #{tpu_custom_call.1} parent=1 // pred_check
      _
    $region27: #{tpu_custom_call.1} parent=1 // pred_check_branch
      %59 = sbr.rel (0) target = $region29
    $region28: #{tpu_custom_call.1} parent=1 // pred_region
      %61 = dma.done [#allocation6], 2048
    $region29: #{tpu_custom_call.1} parent=1 // pred_fallthru
      _
    // Predicated region
    $region30: #{tpu_custom_call.1} parent=1 // pred_check
      _
    $region31: #{tpu_custom_call.1} parent=1 // pred_check_branch
      %63 = sbr.rel (0) target = $region33
    $region32: #{tpu_custom_call.1} parent=1 // pred_region
      %65 = dma.done [#allocation6], 2048
    $region33: #{tpu_custom_call.1} parent=1 // pred_fallthru
      _
    %v66 = vld [vmem:[#allocation2] sm:$0xff]
    %v67 = vld [vmem:[#allocation5] sm:$0xff]
    %v68 = vld [vmem:[#allocation5 + $0x8] sm:$0xff]
    %v69 = vld [vmem:[#allocation5 + $0x10] sm:$0xff]
    %v70 = vld [vmem:[#allocation5 + $0x18] sm:$0xff]
    %v71 = vld [vmem:[#allocation5 + $0x20] sm:$0xff]
    %v72 = vld [vmem:[#allocation5 + $0x28] sm:$0xff]
    %v73 = vld [vmem:[#allocation5 + $0x30] sm:$0xff]
    %v74 = vld [vmem:[#allocation5 + $0x38] sm:$0xff]
    %v75 = vld [vmem:[#allocation5 + $0x40] sm:$0xff]
    %v76 = vld [vmem:[#allocation5 + $0x48] sm:$0xff]
    %v77 = vld [vmem:[#allocation5 + $0x50] sm:$0xff]
    %v78 = vld [vmem:[#allocation5 + $0x58] sm:$0xff]
    %v79 = vld [vmem:[#allocation5 + $0x60] sm:$0xff]
    %v80 = vld [vmem:[#allocation5 + $0x68] sm:$0xff]
    %v81 = vld [vmem:[#allocation5 + $0x70] sm:$0xff]
    %v82 = vld [vmem:[#allocation5 + $0x78] sm:$0xff]
    %v83 = vld [vmem:[%s2] sm:$0x1]
    %v85 = vperm.slane %v83, 0
    %87 = vmatpush.msra.mxu0 %v82
    %88 = vmatpush.msra.mxu0 %v81
    %89 = vmatpush.msra.mxu0 %v80
    %90 = vmatpush.msra.mxu0 %v79
    %91 = vmatpush.msra.mxu0 %v78
    %92 = vmatpush.msra.mxu0 %v77
    %93 = vmatpush.msra.mxu0 %v76
    %94 = vmatpush.msra.mxu0 %v75
    %95 = vmatpush.msra.mxu0 %v74
    %96 = vmatpush.msra.mxu0 %v73
    %97 = vmatpush.msra.mxu0 %v72
    %98 = vmatpush.msra.mxu0 %v71
    %99 = vmatpush.msra.mxu0 %v70
    %100 = vmatpush.msra.mxu0 %v69
    %101 = vmatpush.msra.mxu0 %v68
    %102 = vmatpush.msra.mxu0 %v67
    %103 = vmatmul.f32.gmra.mxu0 %v66
    %v104 = vpop.f32.mrf.mxu0
    %v105 = vadd.f32 %v85, %v104
    %106 = vdwg.mxu0
    %v107 = vtanh.pop %v105
    %v108 = vld [vmem:[#allocation7] sm:$0xff]
    %v109 = vld [vmem:[#allocation7 + $0x8] sm:$0xff]
    %v110 = vld [vmem:[#allocation7 + $0x10] sm:$0xff]
    %v111 = vld [vmem:[#allocation7 + $0x18] sm:$0xff]
    %v112 = vld [vmem:[#allocation7 + $0x20] sm:$0xff]
    %v113 = vld [vmem:[#allocation7 + $0x28] sm:$0xff]
    %v114 = vld [vmem:[#allocation7 + $0x30] sm:$0xff]
    %v115 = vld [vmem:[#allocation7 + $0x38] sm:$0xff]
    %v116 = vld [vmem:[#allocation7 + $0x40] sm:$0xff]
    %v117 = vld [vmem:[#allocation7 + $0x48] sm:$0xff]
    %v118 = vld [vmem:[#allocation7 + $0x50] sm:$0xff]
    %v119 = vld [vmem:[#allocation7 + $0x58] sm:$0xff]
    %v120 = vld [vmem:[#allocation7 + $0x60] sm:$0xff]
    %v121 = vld [vmem:[#allocation7 + $0x68] sm:$0xff]
    %v122 = vld [vmem:[#allocation7 + $0x70] sm:$0xff]
    %v123 = vld [vmem:[#allocation7 + $0x78] sm:$0xff]
    %v124 = vld [vmem:[%s4] sm:$0x1]
    %v126 = vperm.slane %v124, 0
    %128 = vmatpush.msra.mxu0 %v123
    %129 = vmatpush.msra.mxu0 %v122
    %130 = vmatpush.msra.mxu0 %v121
    %131 = vmatpush.msra.mxu0 %v120
    %132 = vmatpush.msra.mxu0 %v119
    %133 = vmatpush.msra.mxu0 %v118
    %134 = vmatpush.msra.mxu0 %v117
    %135 = vmatpush.msra.mxu0 %v116
    %136 = vmatpush.msra.mxu0 %v115
    %137 = vmatpush.msra.mxu0 %v114
    %138 = vmatpush.msra.mxu0 %v113
    %139 = vmatpush.msra.mxu0 %v112
    %140 = vmatpush.msra.mxu0 %v111
    %141 = vmatpush.msra.mxu0 %v110
    %142 = vmatpush.msra.mxu0 %v109
    %143 = vmatpush.msra.mxu0 %v108
    %144 = vmatmul.f32.gmra.mxu0 %v107
    %v145 = vpop.f32.mrf.mxu0
    %v146 = vadd.f32 %v126, %v145
    %147 = vdwg.mxu0
    %148 = vst [vmem:[#allocation8] sm:$0xff] %v146
    // Predicated region
    $region34: #{tpu_custom_call.1} parent=1 // pred_check
      _
    $region35: #{tpu_custom_call.1} parent=1 // pred_check_branch
      %150 = sbr.rel (0) target = $region37
    $region36: #{tpu_custom_call.1} parent=1 // pred_region
      %152 = vsyncadd [#allocation4], 0
      %s154 = sshll.u32 [#allocation8], 4
      %s155 = int_to_ptr.vmem [resolvable:$true] %s154
      %s156 = sshll.u32 %s5, 4
      %s157 = int_to_ptr.hbm [resolvable:$true] %s156
      %159 = dma.vmem_to_hbm [thread:$0]  %s155, 128, %s157, [#allocation4]
    $region37: #{tpu_custom_call.1} parent=1 // pred_fallthru
      _
    // Predicated region
    $region38: #{tpu_custom_call.1} parent=1 // pred_check
      _
    $region39: #{tpu_custom_call.1} parent=1 // pred_check_branch
      %161 = sbr.rel (0) target = $region41
    $region40: #{tpu_custom_call.1} parent=1 // pred_region
      %163 = dma.done [#allocation4], 128
    $region41: #{tpu_custom_call.1} parent=1 // pred_fallthru
      _
    %164 = vsyncpa [#allocation3], 1
    %165 = vsyncpa [#allocation6], 1
    %166 = vsyncpa [#allocation4], 1

</llo_original>
